<compile_context>
chip_gen: v6e
topology: v6e:2x2x1
jax: 0.10.0
libtpu: 0.0.40
codegen_flags: <defaults>
</compile_context>

<pallas_src>
import math

import jax
import jax.numpy as jnp
from jax.experimental import pallas as pl
from jax.experimental.pallas import tpu as pltpu


def _round_up(n, m):
    return ((n + m - 1) // m) * m


_INV_SQRT2 = 0.7071067811865476
# Abramowitz & Stegun 7.1.26 erf coefficients (max abs error 1.5e-7).
_ERF_P = 0.3275911
_ERF_A1 = 0.254829592
_ERF_A2 = -0.284496736
_ERF_A3 = 1.421413741
_ERF_A4 = -1.453152027
_ERF_A5 = 1.061405429


def _erf(z):
    """erf via A&S 7.1.26 (exp + polynomial -> EUP/VPU only, Mosaic-safe)."""
    az = jnp.abs(z)
    t = 1.0 / (1.0 + _ERF_P * az)
    poly = t * (_ERF_A1 + t * (_ERF_A2 + t * (_ERF_A3 + t * (_ERF_A4 + t * _ERF_A5))))
    e = 1.0 - poly * jnp.exp(-(az * az))
    return jnp.where(z < 0.0, -e, e)


def phase2_kernel(x_ref, q_ref, pi_term_ref,
                  w1_ref, b1_ref, w2_ref, b2_ref, w3_ref, b3_ref,
                  pw1_ref, pb1_ref, wd_ref, bd_ref, out_ref):
    # --- mask: m = sigmoid(logit(pi) + logit(Phi(q))), fully in-kernel.
    # (pi term is a precomputed (1,100) VMEM-resident row; per-element EUP work
    # is one exp, two logs and one sigmoid, hidden under the input DMA.)
    u = 0.5 * (1.0 + _erf(q_ref[...] * _INV_SQRT2))
    u = jnp.clip(u, 0.0, 1.0)
    logit_u = jnp.log(u + 1e-8) - jnp.log(1.0 - u + 1e-8)
    m = jax.nn.sigmoid(pi_term_ref[...] + logit_u)                # (TB, 100)
    x_tilde = x_ref[...] * m                                      # (TB, 100)

    def dense(h, w_ref, b_ref, relu=True):
        w = w_ref[...]
        y = (jnp.dot(h.astype(w.dtype), w, preferred_element_type=jnp.float32)
             + b_ref[...])
        return jnp.maximum(y, 0.0) if relu else y

    # --- Encoder: 100 -> 100 -> 100 -> 10, ReLU after each ---
    h = dense(x_tilde, w1_ref, b1_ref)
    h = dense(h, w2_ref, b2_ref)
    z = dense(h, w3_ref, b3_ref)

    # --- Predictor: 10 -> 10 (ReLU) -> 2-class softmax, collapsed head ---
    p = dense(z, pw1_ref, pb1_ref)
    ldiff = dense(p, wd_ref, bd_ref, relu=False)                  # (TB, 1) = l0 - l1
    p0 = jax.nn.sigmoid(ldiff)                                    # softmax class 0
    col = jax.lax.broadcasted_iota(jnp.int32, out_ref.shape, 1)
    out_ref[...] = jnp.where(col == 0, p0, 1.0 - p0)


def phase2_forward(x, q, params, *, tile_b=2048, use_bf16_matmul=True):
    x = x.astype(jnp.float32)
    q = q.astype(jnp.float32)
    B, F = x.shape
    assert F == 100 and q.shape == (B, 100)

    # (1,100) logit(pi) term, computed once (matches PyTorch's log(x+1e-8) form).
    pi = jax.nn.sigmoid(params["pi_logit"])
    pi_term = jnp.log(pi + 1e-8) - jnp.log(1.0 - pi + 1e-8)       # (1, 100)

    # Collapsed 2-class head: softmax([l0,l1]) == [sigmoid(d), 1-sigmoid(d)]
    # with d = p @ (pw2[:,0]-pw2[:,1]) + (pb2[0]-pb2[1]).
    w_diff = params["pw2"][:, 0:1] - params["pw2"][:, 1:2]        # (10, 1)
    b_diff = params["pb2"][:, 0:1] - params["pb2"][:, 1:2]        # (1, 1)

    # MXU operands in bf16 (f32 accumulation); biases and mask math stay f32.
    mm_dtype = jnp.bfloat16 if use_bf16_matmul else jnp.float32
    w1 = params["w1"].astype(mm_dtype)
    w2 = params["w2"].astype(mm_dtype)
    w3 = params["w3"].astype(mm_dtype)
    pw1 = params["pw1"].astype(mm_dtype)
    w_diff = w_diff.astype(mm_dtype)

    # --- batch tiling -----------------------------------------------------
    tile_b = max(8, min(_round_up(int(tile_b), 8), _round_up(B, 8)))
    # Large batches: cap the tile so there are >= 4 grid steps (v7x megacore
    # needs >= 2 steps to shard across its 2 TensorCores; more steps also keep
    # the DMA pipeline fed on v5e/v6e).
    if B >= 2048:
        tile_b = min(tile_b, max(512, _round_up(pl.cdiv(B, 4), 8)))
    grid = (pl.cdiv(B, tile_b),)
    # VMEM: x+q double-buffered at tile_b=2048 is ~3.2 MB + ~80 KB of weights,
    # far below the 32 MiB scoped default on v5e/v6e/v7x -> no vmem_limit.

    def row(bs):   # streamed over the batch
        return pl.BlockSpec(bs, lambda i: (i, 0))

    def cst(bs):   # VMEM-resident across all grid steps (constant index_map)
        return pl.BlockSpec(bs, lambda i: (0, 0))

    args = (x, q, pi_term,
            w1, params["b1"], w2, params["b2"], w3, params["b3"],
            pw1, params["pb1"], w_diff, b_diff)

    in_specs = [
        row((tile_b, 100)),               # x
        row((tile_b, 100)),               # q (raw; mask math fused in-kernel)
        cst((1, 100)),                    # logit(pi)
        cst((100, 100)), cst((1, 100)),   # w1, b1
        cst((100, 100)), cst((1, 100)),   # w2, b2
        cst((100, 10)),  cst((1, 10)),    # w3, b3
        cst((10, 10)),   cst((1, 10)),    # pw1, pb1
        cst((10, 1)),    cst((1, 1)),     # w_diff, b_diff
    ]
    out_specs = pl.BlockSpec((tile_b, 2), lambda i: (i, 0))

    weight_bytes = sum(int(a.size) * a.dtype.itemsize for a in args[2:])
    cost = pl.CostEstimate(
        flops=2 * B * (100 * 100 + 100 * 100 + 100 * 10 + 10 * 10 + 10 * 1)
              + 20 * B * 100,
        transcendentals=4 * B * 100 + B,
        bytes_accessed=2 * B * 100 * 4 + B * 2 * 4 + weight_bytes,
    )

    return pl.pallas_call(
        phase2_kernel,
        out_shape=jax.ShapeDtypeStruct((B, 2), jnp.float32),
        grid_spec=pltpu.PrefetchScalarGridSpec(
            num_scalar_prefetch=0,
            grid=grid,
            in_specs=in_specs,
            out_specs=out_specs,
        ),
        compiler_params=pltpu.CompilerParams(
            dimension_semantics=("parallel",)),
        cost_estimate=cost,
    )(*args)


def init_params(key):
    """Deterministic init mimicking nn.Linear defaults (U(-1/sqrt(fan_in), ..))."""
    def linear(k, fan_in, fan_out):
        kw, kb = jax.random.split(k)
        bound = 1.0 / math.sqrt(fan_in)
        w = jax.random.uniform(kw, (fan_in, fan_out), jnp.float32, -bound, bound)
        b = jax.random.uniform(kb, (1, fan_out), jnp.float32, -bound, bound)
        return w, b

    ks = jax.random.split(key, 5)
    w1, b1 = linear(ks[0], 100, 100)   # enc.linear1
    w2, b2 = linear(ks[1], 100, 100)   # enc.linear2
    w3, b3 = linear(ks[2], 100, 10)    # enc.linear3
    pw1, pb1 = linear(ks[3], 10, 10)   # predictor.linear1
    pw2, pb2 = linear(ks[4], 10, 2)    # predictor.linear2
    return dict(
        pi_logit=jnp.zeros((1, 100), jnp.float32),  # nn.Parameter(zeros(100))
        w1=w1, b1=b1, w2=w2, b2=b2, w3=w3, b3=b3,
        pw1=pw1, pb1=pb1, pw2=pw2, pb2=pb2,
    )


def phase2_reference(x, q, p):
    """Pure-JAX reference of the PyTorch forward (exact erf), for validation."""
    def _log(v):
        return jnp.log(v + 1e-8)
    pi = jax.nn.sigmoid(p["pi_logit"])
    u = 0.5 * (1.0 + jax.lax.erf(q / jnp.float32(math.sqrt(2.0))))
    m = jax.nn.sigmoid(_log(pi) - _log(1.0 - pi) + _log(u) - _log(1.0 - u))
    h = x * m
    h = jax.nn.relu(h @ p["w1"] + p["b1"])
    h = jax.nn.relu(h @ p["w2"] + p["b2"])
    z = jax.nn.relu(h @ p["w3"] + p["b3"])
    z = jax.nn.relu(z @ p["pw1"] + p["pb1"])
    logits = z @ p["pw2"] + p["pb2"]
    return jax.nn.softmax(logits, axis=-1)


if __name__ == "__main__":
    key = jax.random.PRNGKey(0)
    k_x, k_q, k_p = jax.random.split(key, 3)
    params = init_params(k_p)

    # Case 1: f32 MXU path, single tile -> tight tolerance vs. exact-erf reference
    # (only the 1.5e-7 erf polynomial error separates kernel and reference).
    B = 8
    x = jax.random.normal(k_x, (B, 100), jnp.float32)
    q = jax.random.normal(k_q, (B, 100), jnp.float32)
    out = jax.block_until_ready(phase2_forward(x, q, params, use_bf16_matmul=False))
    ref = phase2_reference(x, q, params)
    assert out.shape == (B, 2)
    assert jnp.allclose(out, ref, rtol=1e-5, atol=1e-5), "mismatch vs reference (f32, B=8)"
    assert jnp.allclose(jnp.sum(out, axis=-1), 1.0, atol=1e-5), "softmax rows != 1"

    # Case 2: default path (bf16 MXU operands, f32 accumulation), multi-step grid
    # with a partial last tile; bf16 operand rounding -> looser tolerance.
    B2 = 300
    x2 = jax.random.normal(jax.random.fold_in(k_x, 1), (B2, 100), jnp.float32)
    q2 = jax.random.normal(jax.random.fold_in(k_q, 1), (B2, 100), jnp.float32)
    out2 = jax.block_until_ready(phase2_forward(x2, q2, params, tile_b=128))
    ref2 = phase2_reference(x2, q2, params)
    assert out2.shape == (B2, 2)
    assert jnp.allclose(out2, ref2, rtol=0.0, atol=3e-2), "mismatch vs reference (bf16, B=300)"
    assert jnp.allclose(jnp.sum(out2, axis=-1), 1.0, atol=1e-5), "softmax rows != 1"

    print("KERNEL_OK")
</pallas_src>

<mosaic_0001>
module attributes {stable_mosaic.version = 11 : i64} {
  func.func @phase2_kernel(%arg0: i32, %arg1: memref<8x100xf32, #tpu.memory_space<vmem>>, %arg2: memref<8x100xf32, #tpu.memory_space<vmem>>, %arg3: memref<1x100xf32, #tpu.memory_space<vmem>>, %arg4: memref<100x100xf32, #tpu.memory_space<vmem>>, %arg5: memref<1x100xf32, #tpu.memory_space<vmem>>, %arg6: memref<100x100xf32, #tpu.memory_space<vmem>>, %arg7: memref<1x100xf32, #tpu.memory_space<vmem>>, %arg8: memref<100x10xf32, #tpu.memory_space<vmem>>, %arg9: memref<1x10xf32, #tpu.memory_space<vmem>>, %arg10: memref<10x10xf32, #tpu.memory_space<vmem>>, %arg11: memref<1x10xf32, #tpu.memory_space<vmem>>, %arg12: memref<10x1xf32, #tpu.memory_space<vmem>>, %arg13: memref<1x1xf32, #tpu.memory_space<vmem>>, %arg14: memref<8x2xf32, #tpu.memory_space<vmem>>) attributes {dimension_semantics = [#tpu.dimension_semantics<parallel>], iteration_bounds = array<i64: 1>, scalar_prefetch = 0 : i64, scratch_operands = 0 : i64, tpu.core_type = #tpu.core_type<tc>, window_params = [{transform_indices = @transform_0, window_bounds = array<i64: 8, 100>}, {transform_indices = @transform_1, window_bounds = array<i64: 8, 100>}, {pipeline_mode = #tpu.pipeline_mode<synchronous>, transform_indices = @transform_2, window_bounds = array<i64: 1, 100>}, {pipeline_mode = #tpu.pipeline_mode<synchronous>, transform_indices = @transform_3, window_bounds = array<i64: 100, 100>}, {pipeline_mode = #tpu.pipeline_mode<synchronous>, transform_indices = @transform_4, window_bounds = array<i64: 1, 100>}, {pipeline_mode = #tpu.pipeline_mode<synchronous>, transform_indices = @transform_5, window_bounds = array<i64: 100, 100>}, {pipeline_mode = #tpu.pipeline_mode<synchronous>, transform_indices = @transform_6, window_bounds = array<i64: 1, 100>}, {pipeline_mode = #tpu.pipeline_mode<synchronous>, transform_indices = @transform_7, window_bounds = array<i64: 100, 10>}, {pipeline_mode = #tpu.pipeline_mode<synchronous>, transform_indices = @transform_8, window_bounds = array<i64: 1, 10>}, {pipeline_mode = #tpu.pipeline_mode<synchronous>, transform_indices = @transform_9, window_bounds = array<i64: 10, 10>}, {pipeline_mode = #tpu.pipeline_mode<synchronous>, transform_indices = @transform_10, window_bounds = array<i64: 1, 10>}, {pipeline_mode = #tpu.pipeline_mode<synchronous>, transform_indices = @transform_11, window_bounds = array<i64: 10, 1>}, {pipeline_mode = #tpu.pipeline_mode<synchronous>, transform_indices = @transform_12, window_bounds = array<i64: 1, 1>}, {transform_indices = @transform_13, window_bounds = array<i64: 8, 2>}]} {
    %c0 = arith.constant 0 : index
    %c0_0 = arith.constant 0 : index
    %0 = vector.load %arg2[%c0, %c0_0] : memref<8x100xf32, #tpu.memory_space<vmem>>, vector<8x100xf32>
    %cst = arith.constant 0.707106769 : f32
    %1 = vector.broadcast %cst : f32 to vector<8x100xf32>
    %2 = arith.mulf %0, %1 : vector<8x100xf32>
    %3 = math.absf %2 : vector<8x100xf32>
    %cst_1 = arith.constant 0.327591091 : f32
    %4 = vector.broadcast %cst_1 : f32 to vector<8x100xf32>
    %5 = arith.mulf %4, %3 : vector<8x100xf32>
    %cst_2 = arith.constant 1.000000e+00 : f32
    %6 = vector.broadcast %cst_2 : f32 to vector<8x100xf32>
    %7 = arith.addf %6, %5 : vector<8x100xf32>
    %cst_3 = arith.constant 1.000000e+00 : f32
    %8 = vector.broadcast %cst_3 : f32 to vector<8x100xf32>
    %9 = arith.divf %8, %7 : vector<8x100xf32>
    %cst_4 = arith.constant 1.06140542 : f32
    %10 = vector.broadcast %cst_4 : f32 to vector<8x100xf32>
    %11 = arith.mulf %9, %10 : vector<8x100xf32>
    %cst_5 = arith.constant -1.45315206 : f32
    %12 = vector.broadcast %cst_5 : f32 to vector<8x100xf32>
    %13 = arith.addf %12, %11 : vector<8x100xf32>
    %14 = arith.mulf %9, %13 : vector<8x100xf32>
    %cst_6 = arith.constant 1.42141378 : f32
    %15 = vector.broadcast %cst_6 : f32 to vector<8x100xf32>
    %16 = arith.addf %15, %14 : vector<8x100xf32>
    %17 = arith.mulf %9, %16 : vector<8x100xf32>
    %cst_7 = arith.constant -0.284496725 : f32
    %18 = vector.broadcast %cst_7 : f32 to vector<8x100xf32>
    %19 = arith.addf %18, %17 : vector<8x100xf32>
    %20 = arith.mulf %9, %19 : vector<8x100xf32>
    %cst_8 = arith.constant 0.254829586 : f32
    %21 = vector.broadcast %cst_8 : f32 to vector<8x100xf32>
    %22 = arith.addf %21, %20 : vector<8x100xf32>
    %23 = arith.mulf %9, %22 : vector<8x100xf32>
    %24 = arith.mulf %3, %3 : vector<8x100xf32>
    %cst_9 = arith.constant 0.000000e+00 : f32
    %25 = vector.broadcast %cst_9 : f32 to vector<8x100xf32>
    %26 = arith.subf %25, %24 : vector<8x100xf32>
    %27 = math.exp %26 : vector<8x100xf32>
    %28 = arith.mulf %23, %27 : vector<8x100xf32>
    %cst_10 = arith.constant 1.000000e+00 : f32
    %29 = vector.broadcast %cst_10 : f32 to vector<8x100xf32>
    %30 = arith.subf %29, %28 : vector<8x100xf32>
    %cst_11 = arith.constant 0.000000e+00 : f32
    %31 = vector.broadcast %cst_11 : f32 to vector<8x100xf32>
    %32 = arith.cmpf olt, %2, %31 : vector<8x100xf32>
    %cst_12 = arith.constant 0.000000e+00 : f32
    %33 = vector.broadcast %cst_12 : f32 to vector<8x100xf32>
    %34 = arith.subf %33, %30 : vector<8x100xf32>
    %35 = arith.select %32, %34, %30 : vector<8x100xi1>, vector<8x100xf32>
    %cst_13 = arith.constant 1.000000e+00 : f32
    %36 = vector.broadcast %cst_13 : f32 to vector<8x100xf32>
    %37 = arith.addf %36, %35 : vector<8x100xf32>
    %cst_14 = arith.constant 5.000000e-01 : f32
    %38 = vector.broadcast %cst_14 : f32 to vector<8x100xf32>
    %39 = arith.mulf %38, %37 : vector<8x100xf32>
    %cst_15 = arith.constant 0.000000e+00 : f32
    %cst_16 = arith.constant 1.000000e+00 : f32
    %40 = vector.broadcast %cst_15 : f32 to vector<8x100xf32>
    %41 = arith.maximumf %40, %39 : vector<8x100xf32>
    %42 = vector.broadcast %cst_16 : f32 to vector<8x100xf32>
    %43 = arith.minimumf %42, %41 : vector<8x100xf32>
    %cst_17 = arith.constant 9.99999993E-9 : f32
    %44 = vector.broadcast %cst_17 : f32 to vector<8x100xf32>
    %45 = arith.addf %43, %44 : vector<8x100xf32>
    %46 = math.log %45 : vector<8x100xf32>
    %cst_18 = arith.constant 1.000000e+00 : f32
    %47 = vector.broadcast %cst_18 : f32 to vector<8x100xf32>
    %48 = arith.subf %47, %43 : vector<8x100xf32>
    %cst_19 = arith.constant 9.99999993E-9 : f32
    %49 = vector.broadcast %cst_19 : f32 to vector<8x100xf32>
    %50 = arith.addf %48, %49 : vector<8x100xf32>
    %51 = math.log %50 : vector<8x100xf32>
    %52 = arith.subf %46, %51 : vector<8x100xf32>
    %c0_20 = arith.constant 0 : index
    %c0_21 = arith.constant 0 : index
    %53 = vector.load %arg3[%c0_20, %c0_21] : memref<1x100xf32, #tpu.memory_space<vmem>>, vector<1x100xf32>
    %54 = vector.broadcast %53 : vector<1x100xf32> to vector<8x100xf32>
    %55 = arith.addf %54, %52 : vector<8x100xf32>
    %56 = arith.negf %55 : vector<8x100xf32>
    %57 = math.exp %56 : vector<8x100xf32>
    %cst_22 = arith.constant 1.000000e+00 : f32
    %58 = vector.broadcast %cst_22 : f32 to vector<8x100xf32>
    %59 = arith.addf %58, %57 : vector<8x100xf32>
    %60 = arith.divf %58, %59 : vector<8x100xf32>
    %c0_23 = arith.constant 0 : index
    %c0_24 = arith.constant 0 : index
    %61 = vector.load %arg1[%c0_23, %c0_24] : memref<8x100xf32, #tpu.memory_space<vmem>>, vector<8x100xf32>
    %62 = arith.mulf %61, %60 : vector<8x100xf32>
    %c0_25 = arith.constant 0 : index
    %c0_26 = arith.constant 0 : index
    %63 = vector.load %arg4[%c0_25, %c0_26] : memref<100x100xf32, #tpu.memory_space<vmem>>, vector<100x100xf32>
    %cst_27 = arith.constant dense<0.000000e+00> : vector<8x100xf32>
    %64 = tpu.matmul %62, %63, %cst_27 {dimension_numbers = #tpu.dot_dimension_numbers<[1], [0], [0], [1], [0, 0, 1, 1], [], []>} : vector<8x100xf32>, vector<100x100xf32>, vector<8x100xf32> -> vector<8x100xf32>
    %c0_28 = arith.constant 0 : index
    %c0_29 = arith.constant 0 : index
    %65 = vector.load %arg5[%c0_28, %c0_29] : memref<1x100xf32, #tpu.memory_space<vmem>>, vector<1x100xf32>
    %66 = vector.broadcast %65 : vector<1x100xf32> to vector<8x100xf32>
    %67 = arith.addf %64, %66 : vector<8x100xf32>
    %cst_30 = arith.constant 0.000000e+00 : f32
    %68 = vector.broadcast %cst_30 : f32 to vector<8x100xf32>
    %69 = arith.maximumf %67, %68 : vector<8x100xf32>
    %c0_31 = arith.constant 0 : index
    %c0_32 = arith.constant 0 : index
    %70 = vector.load %arg6[%c0_31, %c0_32] : memref<100x100xf32, #tpu.memory_space<vmem>>, vector<100x100xf32>
    %cst_33 = arith.constant dense<0.000000e+00> : vector<8x100xf32>
    %71 = tpu.matmul %69, %70, %cst_33 {dimension_numbers = #tpu.dot_dimension_numbers<[1], [0], [0], [1], [0, 0, 1, 1], [], []>} : vector<8x100xf32>, vector<100x100xf32>, vector<8x100xf32> -> vector<8x100xf32>
    %c0_34 = arith.constant 0 : index
    %c0_35 = arith.constant 0 : index
    %72 = vector.load %arg7[%c0_34, %c0_35] : memref<1x100xf32, #tpu.memory_space<vmem>>, vector<1x100xf32>
    %73 = vector.broadcast %72 : vector<1x100xf32> to vector<8x100xf32>
    %74 = arith.addf %71, %73 : vector<8x100xf32>
    %cst_36 = arith.constant 0.000000e+00 : f32
    %75 = vector.broadcast %cst_36 : f32 to vector<8x100xf32>
    %76 = arith.maximumf %74, %75 : vector<8x100xf32>
    %c0_37 = arith.constant 0 : index
    %c0_38 = arith.constant 0 : index
    %77 = vector.load %arg8[%c0_37, %c0_38] : memref<100x10xf32, #tpu.memory_space<vmem>>, vector<100x10xf32>
    %cst_39 = arith.constant dense<0.000000e+00> : vector<8x10xf32>
    %78 = tpu.matmul %76, %77, %cst_39 {dimension_numbers = #tpu.dot_dimension_numbers<[1], [0], [0], [1], [0, 0, 1, 1], [], []>} : vector<8x100xf32>, vector<100x10xf32>, vector<8x10xf32> -> vector<8x10xf32>
    %c0_40 = arith.constant 0 : index
    %c0_41 = arith.constant 0 : index
    %79 = vector.load %arg9[%c0_40, %c0_41] : memref<1x10xf32, #tpu.memory_space<vmem>>, vector<1x10xf32>
    %80 = vector.broadcast %79 : vector<1x10xf32> to vector<8x10xf32>
    %81 = arith.addf %78, %80 : vector<8x10xf32>
    %cst_42 = arith.constant 0.000000e+00 : f32
    %82 = vector.broadcast %cst_42 : f32 to vector<8x10xf32>
    %83 = arith.maximumf %81, %82 : vector<8x10xf32>
    %c0_43 = arith.constant 0 : index
    %c0_44 = arith.constant 0 : index
    %84 = vector.load %arg10[%c0_43, %c0_44] : memref<10x10xf32, #tpu.memory_space<vmem>>, vector<10x10xf32>
    %cst_45 = arith.constant dense<0.000000e+00> : vector<8x10xf32>
    %85 = tpu.matmul %83, %84, %cst_45 {dimension_numbers = #tpu.dot_dimension_numbers<[1], [0], [0], [1], [0, 0, 1, 1], [], []>} : vector<8x10xf32>, vector<10x10xf32>, vector<8x10xf32> -> vector<8x10xf32>
    %c0_46 = arith.constant 0 : index
    %c0_47 = arith.constant 0 : index
    %86 = vector.load %arg11[%c0_46, %c0_47] : memref<1x10xf32, #tpu.memory_space<vmem>>, vector<1x10xf32>
    %87 = vector.broadcast %86 : vector<1x10xf32> to vector<8x10xf32>
    %88 = arith.addf %85, %87 : vector<8x10xf32>
    %cst_48 = arith.constant 0.000000e+00 : f32
    %89 = vector.broadcast %cst_48 : f32 to vector<8x10xf32>
    %90 = arith.maximumf %88, %89 : vector<8x10xf32>
    %c0_49 = arith.constant 0 : index
    %c0_50 = arith.constant 0 : index
    %91 = vector.load %arg12[%c0_49, %c0_50] : memref<10x1xf32, #tpu.memory_space<vmem>>, vector<10x1xf32>
    %cst_51 = arith.constant dense<0.000000e+00> : vector<8x1xf32>
    %92 = tpu.matmul %90, %91, %cst_51 {dimension_numbers = #tpu.dot_dimension_numbers<[1], [0], [0], [1], [0, 0, 1, 1], [], []>} : vector<8x10xf32>, vector<10x1xf32>, vector<8x1xf32> -> vector<8x1xf32>
    %c0_52 = arith.constant 0 : index
    %c0_53 = arith.constant 0 : index
    %93 = vector.load %arg13[%c0_52, %c0_53] : memref<1x1xf32, #tpu.memory_space<vmem>>, vector<1x1xf32>
    %94 = vector.broadcast %93 : vector<1x1xf32> to vector<8x1xf32>
    %95 = arith.addf %92, %94 : vector<8x1xf32>
    %96 = arith.negf %95 : vector<8x1xf32>
    %97 = math.exp %96 : vector<8x1xf32>
    %cst_54 = arith.constant 1.000000e+00 : f32
    %98 = vector.broadcast %cst_54 : f32 to vector<8x1xf32>
    %99 = arith.addf %98, %97 : vector<8x1xf32>
    %100 = arith.divf %98, %99 : vector<8x1xf32>
    %101 = tpu.iota {dimensions = array<i32: 1>} : vector<8x2xi32>
    %c0_i32 = arith.constant 0 : i32
    %102 = vector.broadcast %c0_i32 : i32 to vector<8x2xi32>
    %103 = arith.cmpi eq, %101, %102 : vector<8x2xi32>
    %cst_55 = arith.constant 1.000000e+00 : f32
    %104 = vector.broadcast %cst_55 : f32 to vector<8x1xf32>
    %105 = arith.subf %104, %100 : vector<8x1xf32>
    %106 = vector.shape_cast %100 : vector<8x1xf32> to vector<8x1xf32>
    %107 = vector.broadcast %106 : vector<8x1xf32> to vector<8x2xf32>
    %108 = vector.shape_cast %105 : vector<8x1xf32> to vector<8x1xf32>
    %109 = vector.broadcast %108 : vector<8x1xf32> to vector<8x2xf32>
    %110 = arith.select %103, %107, %109 : vector<8x2xi1>, vector<8x2xf32>
    %c0_56 = arith.constant 0 : index
    %c0_57 = arith.constant 0 : index
    %111 = vector.load %arg14[%c0_56, %c0_57] : memref<8x2xf32, #tpu.memory_space<vmem>>, vector<8x2xf32>
    tpu.vector_store %arg14[%c0_56, %c0_57], %110 {strides = array<i32>} : memref<8x2xf32, #tpu.memory_space<vmem>>, vector<8x2xf32>,
    return
  }
  func.func @transform_0(%arg0: i32) -> (i32, i32) {
    %c0_i32 = arith.constant 0 : i32
    %c0_i32_0 = arith.constant 0 : i32
    return %arg0, %c0_i32 : i32, i32
  }
  func.func @transform_1(%arg0: i32) -> (i32, i32) {
    %c0_i32 = arith.constant 0 : i32
    %c0_i32_0 = arith.constant 0 : i32
    return %arg0, %c0_i32 : i32, i32
  }
  func.func @transform_2(%arg0: i32) -> (i32, i32) {
    %c0_i32 = arith.constant 0 : i32
    %c0_i32_0 = arith.constant 0 : i32
    %c0_i32_1 = arith.constant 0 : i32
    return %c0_i32, %c0_i32_0 : i32, i32
  }
  func.func @transform_3(%arg0: i32) -> (i32, i32) {
    %c0_i32 = arith.constant 0 : i32
    %c0_i32_0 = arith.constant 0 : i32
    %c0_i32_1 = arith.constant 0 : i32
    return %c0_i32, %c0_i32_0 : i32, i32
  }
  func.func @transform_4(%arg0: i32) -> (i32, i32) {
    %c0_i32 = arith.constant 0 : i32
    %c0_i32_0 = arith.constant 0 : i32
    %c0_i32_1 = arith.constant 0 : i32
    return %c0_i32, %c0_i32_0 : i32, i32
  }
  func.func @transform_5(%arg0: i32) -> (i32, i32) {
    %c0_i32 = arith.constant 0 : i32
    %c0_i32_0 = arith.constant 0 : i32
    %c0_i32_1 = arith.constant 0 : i32
    return %c0_i32, %c0_i32_0 : i32, i32
  }
  func.func @transform_6(%arg0: i32) -> (i32, i32) {
    %c0_i32 = arith.constant 0 : i32
    %c0_i32_0 = arith.constant 0 : i32
    %c0_i32_1 = arith.constant 0 : i32
    return %c0_i32, %c0_i32_0 : i32, i32
  }
  func.func @transform_7(%arg0: i32) -> (i32, i32) {
    %c0_i32 = arith.constant 0 : i32
    %c0_i32_0 = arith.constant 0 : i32
    %c0_i32_1 = arith.constant 0 : i32
    return %c0_i32, %c0_i32_0 : i32, i32
  }
  func.func @transform_8(%arg0: i32) -> (i32, i32) {
    %c0_i32 = arith.constant 0 : i32
    %c0_i32_0 = arith.constant 0 : i32
    %c0_i32_1 = arith.constant 0 : i32
    return %c0_i32, %c0_i32_0 : i32, i32
  }
  func.func @transform_9(%arg0: i32) -> (i32, i32) {
    %c0_i32 = arith.constant 0 : i32
    %c0_i32_0 = arith.constant 0 : i32
    %c0_i32_1 = arith.constant 0 : i32
    return %c0_i32, %c0_i32_0 : i32, i32
  }
  func.func @transform_10(%arg0: i32) -> (i32, i32) {
    %c0_i32 = arith.constant 0 : i32
    %c0_i32_0 = arith.constant 0 : i32
    %c0_i32_1 = arith.constant 0 : i32
    return %c0_i32, %c0_i32_0 : i32, i32
  }
  func.func @transform_11(%arg0: i32) -> (i32, i32) {
    %c0_i32 = arith.constant 0 : i32
    %c0_i32_0 = arith.constant 0 : i32
    %c0_i32_1 = arith.constant 0 : i32
    return %c0_i32, %c0_i32_0 : i32, i32
  }
  func.func @transform_12(%arg0: i32) -> (i32, i32) {
    %c0_i32 = arith.constant 0 : i32
    %c0_i32_0 = arith.constant 0 : i32
    %c0_i32_1 = arith.constant 0 : i32
    return %c0_i32, %c0_i32_0 : i32, i32
  }
  func.func @transform_13(%arg0: i32) -> (i32, i32) {
    %c0_i32 = arith.constant 0 : i32
    %c0_i32_0 = arith.constant 0 : i32
    return %arg0, %c0_i32 : i32, i32
  }
}

</mosaic_0001>

<llo_original>
// kernel: tpu_custom_call.1
$region0: #{tpu_custom_call.1}
  #allocation0 [shape = 'u32[]', space=smem, size = 0x4, offset = 0x4, fixed_abs, tag = 'smem constant byte address 0x4 - core index']
  #allocation1 [shape = 'u32[144,128]{1,0:T(1,128)}', space=vmem, size = 0x12000, scoped, tag = 'internal scratch']
  #allocation2 [shape = 'f32[1,1]{1,0:T(1,128)S(1)}', space=vmem, size = 0x200, scoped, tag = 'scoped memory for tpu_custom_call.1']
  %s0 = inlined_call_operand.vmem [shape: f32[8,100], index: 0, kind: input, shape index: {}]
  %s1 = inlined_call_operand.hbm [shape: f32[8,100], index: 1, kind: input, shape index: {}]
  %s2 = inlined_call_operand.vmem [shape: f32[1,100], index: 2, kind: input, shape index: {}]
  %s3 = inlined_call_operand.vmem [shape: f32[100,100], index: 3, kind: input, shape index: {}]
  %s4 = inlined_call_operand.vmem [shape: f32[1,100], index: 4, kind: input, shape index: {}]
  %s5 = inlined_call_operand.hbm [shape: f32[100,100], index: 5, kind: input, shape index: {}]
  %s6 = inlined_call_operand.vmem [shape: f32[1,100], index: 6, kind: input, shape index: {}]
  %s7 = inlined_call_operand.vmem [shape: f32[100,10], index: 7, kind: input, shape index: {}]
  %s8 = inlined_call_operand.vmem [shape: f32[1,10], index: 8, kind: input, shape index: {}]
  %s9 = inlined_call_operand.vmem [shape: f32[10,10], index: 9, kind: input, shape index: {}]
  %s10 = inlined_call_operand.vmem [shape: f32[1,10], index: 10, kind: input, shape index: {}]
  %s11 = inlined_call_operand.vmem [shape: f32[10,1], index: 11, kind: input, shape index: {}]
  %s12 = inlined_call_operand.<no memory space> [shape: f32[1,1], index: 12, kind: input, shape index: {}]
  %s13 = inlined_call_operand.vmem [shape: f32[8,2], index: 13, kind: output, shape index: {}]
  %s14 = sld [smem:[#allocation0]]
  $region70: #{tpu_custom_call.1} parent=0
    _
  %s16 = ssub.s32 1, %s14
  %s17 = scalar_select 0, %s16, %s14
  %v18 = vstv %s12
  %19 = vst [vmem:[#allocation2] sm:$0x1] %v18
  $region1: #{tpu_custom_call.1} parent=0
    #allocation3 [shape = 'u8[4096]{0}', space=vmem, size = 0x1000, scoped, tag = 'input window, operand 1, single buffered']
    #allocation4 [shape = 's32[1]{0}', space=sflag, size = 0x4, scoped, tag = 'scoped memory for tpu_custom_call.1']
    #allocation5 [shape = 'u8[53248]{0}', space=vmem, size = 0xd000, scoped, tag = 'input window, operand 5, single buffered']
    #allocation6 [shape = 's32[1]{0}', space=sflag, size = 0x4, scoped, tag = 'scoped memory for tpu_custom_call.1']
    %20 = vsyncpa [#allocation4], 0
    %21 = vsyncpa [#allocation6], 0
    // Predicated region
    $region2: #{tpu_custom_call.1} parent=1 // pred_check
      _
    $region3: #{tpu_custom_call.1} parent=1 // pred_check_branch
      %23 = sbr.rel (0) target = $region5
    $region4: #{tpu_custom_call.1} parent=1 // pred_region
      _
    $region5: #{tpu_custom_call.1} parent=1 // pred_fallthru
      _
    // Predicated region
    $region6: #{tpu_custom_call.1} parent=1 // pred_check
      _
    $region7: #{tpu_custom_call.1} parent=1 // pred_check_branch
      %25 = sbr.rel (0) target = $region9
    $region8: #{tpu_custom_call.1} parent=1 // pred_region
      %s27 = ssub.s32 128, 128
      %28 = vsyncadd [#allocation4], %s27
      %s30 = sshll.u32 [#allocation3], 4
      %s31 = int_to_ptr.vmem [resolvable:$true] %s30
      %33 = dma.hbm_to_vmem [thread:$0]  %s1, 128, %s31, [#allocation4]
    $region9: #{tpu_custom_call.1} parent=1 // pred_fallthru
      _
    // Predicated region
    $region10: #{tpu_custom_call.1} parent=1 // pred_check
      _
    $region11: #{tpu_custom_call.1} parent=1 // pred_check_branch
      %35 = sbr.rel (0) target = $region13
    $region12: #{tpu_custom_call.1} parent=1 // pred_region
      _
    $region13: #{tpu_custom_call.1} parent=1 // pred_fallthru
      _
    // Predicated region
    $region14: #{tpu_custom_call.1} parent=1 // pred_check
      _
    $region15: #{tpu_custom_call.1} parent=1 // pred_check_branch
      %37 = sbr.rel (0) target = $region17
    $region16: #{tpu_custom_call.1} parent=1 // pred_region
      _
    $region17: #{tpu_custom_call.1} parent=1 // pred_fallthru
      _
    // Predicated region
    $region18: #{tpu_custom_call.1} parent=1 // pred_check
      _
    $region19: #{tpu_custom_call.1} parent=1 // pred_check_branch
      %39 = sbr.rel (0) target = $region21
    $region20: #{tpu_custom_call.1} parent=1 // pred_region
      _
    $region21: #{tpu_custom_call.1} parent=1 // pred_fallthru
      _
    // Predicated region
    $region22: #{tpu_custom_call.1} parent=1 // pred_check
      _
    $region23: #{tpu_custom_call.1} parent=1 // pred_check_branch
      %41 = sbr.rel (0) target = $region25
    $region24: #{tpu_custom_call.1} parent=1 // pred_region
      %s43 = ssub.s32 1664, 1664
      %44 = vsyncadd [#allocation6], %s43
      %s45 = sshll.u32 [#allocation5], 4
      %s46 = int_to_ptr.vmem [resolvable:$true] %s45
      %51 = dma.hbm_to_vmem [thread:$0]  %s5, 1664, %s46, [#allocation6], 128, 128, 8
    $region25: #{tpu_custom_call.1} parent=1 // pred_fallthru
      _
    // Predicated region
    $region26: #{tpu_custom_call.1} parent=1 // pred_check
      _
    $region27: #{tpu_custom_call.1} parent=1 // pred_check_branch
      %53 = sbr.rel (0) target = $region29
    $region28: #{tpu_custom_call.1} parent=1 // pred_region
      _
    $region29: #{tpu_custom_call.1} parent=1 // pred_fallthru
      _
    // Predicated region
    $region30: #{tpu_custom_call.1} parent=1 // pred_check
      _
    $region31: #{tpu_custom_call.1} parent=1 // pred_check_branch
      %55 = sbr.rel (0) target = $region33
    $region32: #{tpu_custom_call.1} parent=1 // pred_region
      _
    $region33: #{tpu_custom_call.1} parent=1 // pred_fallthru
      _
    // Predicated region
    $region34: #{tpu_custom_call.1} parent=1 // pred_check
      _
    $region35: #{tpu_custom_call.1} parent=1 // pred_check_branch
      %57 = sbr.rel (0) target = $region37
    $region36: #{tpu_custom_call.1} parent=1 // pred_region
      _
    $region37: #{tpu_custom_call.1} parent=1 // pred_fallthru
      _
    // Predicated region
    $region38: #{tpu_custom_call.1} parent=1 // pred_check
      _
    $region39: #{tpu_custom_call.1} parent=1 // pred_check_branch
      %59 = sbr.rel (0) target = $region41
    $region40: #{tpu_custom_call.1} parent=1 // pred_region
      _
    $region41: #{tpu_custom_call.1} parent=1 // pred_fallthru
      _
    // Predicated region
    $region42: #{tpu_custom_call.1} parent=1 // pred_check
      _
    $region43: #{tpu_custom_call.1} parent=1 // pred_check_branch
      %61 = sbr.rel (0) target = $region45
    $region44: #{tpu_custom_call.1} parent=1 // pred_region
      _
    $region45: #{tpu_custom_call.1} parent=1 // pred_fallthru
      _
    // Predicated region
    $region46: #{tpu_custom_call.1} parent=1 // pred_check
      _
    $region47: #{tpu_custom_call.1} parent=1 // pred_check_branch
      %63 = sbr.rel (0) target = $region49
    $region48: #{tpu_custom_call.1} parent=1 // pred_region
      _
    $region49: #{tpu_custom_call.1} parent=1 // pred_fallthru
      _
    // Predicated region
    $region50: #{tpu_custom_call.1} parent=1 // pred_check
      _
    $region51: #{tpu_custom_call.1} parent=1 // pred_check_branch
      %65 = sbr.rel (0) target = $region53
    $region52: #{tpu_custom_call.1} parent=1 // pred_region
      _
    $region53: #{tpu_custom_call.1} parent=1 // pred_fallthru
      _
    // Predicated region
    $region54: #{tpu_custom_call.1} parent=1 // pred_check
      _
    $region55: #{tpu_custom_call.1} parent=1 // pred_check_branch
      %67 = sbr.rel (0) target = $region57
    $region56: #{tpu_custom_call.1} parent=1 // pred_region
      %68 = dma.done [#allocation4], 128
    $region57: #{tpu_custom_call.1} parent=1 // pred_fallthru
      _
    // Predicated region
    $region58: #{tpu_custom_call.1} parent=1 // pred_check
      _
    $region59: #{tpu_custom_call.1} parent=1 // pred_check_branch
      %70 = sbr.rel (0) target = $region61
    $region60: #{tpu_custom_call.1} parent=1 // pred_region
      %71 = dma.done [#allocation6], 1664
    $region61: #{tpu_custom_call.1} parent=1 // pred_fallthru
      _
    %v72 = vld [vmem:[#allocation3] sm:$0xff]
    %v73 = vmul.f32 %v72, 0.70710677
    %v74 = vand.u32 2147483647, %v73
    %v75 = vmul.f32 %v74, 0.3275911
    %v76 = vadd.f32 %v75, 1.0
    %v77 = vrcp.pop %v76
    %v78 = vmul.f32 1.0, %v77
    %v79 = vmul.f32 %v78, 1.0614054
    %v80 = vadd.f32 %v79, -1.4531521
    %v81 = vmul.f32 %v78, %v80
    %v82 = vadd.f32 %v81, 1.4214138
    %v83 = vmul.f32 %v78, %v82
    %v84 = vadd.f32 %v83, -0.28449672
    %v85 = vmul.f32 %v78, %v84
    %v86 = vadd.f32 %v85, 0.2548296
    %v87 = vmul.f32 %v78, %v86
    %v88 = vmul.f32 %v74, %v74
    %v89 = vsub.f32 0.0, %v88
    %v90 = vmul.f32 %v89, 1.442695
    %v91 = vpow.pop %v90
    %v92 = vmul.f32 %v87, %v91
    %v93 = vsub.f32 1.0, %v92
    %vm94 = vcmp.lt.f32.partialorder %v73, 0.0
    %v95 = vsub.f32 0.0, %v93
    %v96 = vsel %vm94, %v95, %v93
    %v97 = vadd.f32 %v96, 1.0
    %v98 = vmul.f32 %v97, 0.5
    %v99 = vmax.f32 %v98, 0.0
    %v100 = vmin.f32 %v99, 1.0
    %v101 = vadd.f32 %v100, 1e-08
    %v102 = vlog2.pop %v101
    %v103 = vmul.f32 %v102, 0.6931472
    %v104 = vsub.f32 1.0, %v100
    %v105 = vadd.f32 %v104, 1e-08
    %v106 = vlog2.pop %v105
    %v107 = vmul.f32 %v106, 0.6931472
    %v108 = vsub.f32 %v103, %v107
    %v109 = vld [vmem:[%s2] sm:$0x1]
    %v111 = vlaneseq
    %v112 = vshrl.u32 %v111, 7
    %v113 = vsub.s32 0, %v112
    %v114 = vrot.slane %v109, %v113
    %v116 = vadd.f32 %v114, %v108
    %v117 = vxor.u32 %v116, 2147483648
    %v118 = vmul.f32 %v117, 1.442695
    %v119 = vpow.pop %v118
    %v120 = vadd.f32 %v119, 1.0
    %v121 = vrcp.pop %v120
    %v122 = vmul.f32 1.0, %v121
    %v123 = vld [vmem:[%s0] sm:$0xff]
    %v124 = vmul.f32 %v123, %v122
    %v125 = vld [vmem:[%s3] sm:$0xff]
    %v126 = vld [vmem:[%s3 + $0x8] sm:$0xff]
    %v127 = vld [vmem:[%s3 + $0x10] sm:$0xff]
    %v128 = vld [vmem:[%s3 + $0x18] sm:$0xff]
    %v129 = vld [vmem:[%s3 + $0x20] sm:$0xff]
    %v130 = vld [vmem:[%s3 + $0x28] sm:$0xff]
    %v131 = vld [vmem:[%s3 + $0x30] sm:$0xff]
    %v132 = vld [vmem:[%s3 + $0x38] sm:$0xff]
    %v133 = vld [vmem:[%s3 + $0x40] sm:$0xff]
    %v134 = vld [vmem:[%s3 + $0x48] sm:$0xff]
    %v135 = vld [vmem:[%s3 + $0x50] sm:$0xff]
    %v136 = vld [vmem:[%s3 + $0x58] sm:$0xff]
    %v137 = vld [vmem:[%s3 + $0x60] sm:$0xf]
    %v138 = vld [vmem:[%s4] sm:$0x1]
    %v140 = vlaneseq
    %v141 = vshrl.u32 %v140, 7
    %v142 = vsub.s32 0, %v141
    %v143 = vrot.slane %v138, %v142
    %vm145 = vcmask 818176
    %v147 = vsel %vm145, %v124, 0
    %vm149 = vcmask 1043456
    %v151 = vsel %vm149, %v137, 0
    %153 = vmatprep.subr.mxu0 0.0
    %154 = vmatpush1.msra.mxu0 0.0
    %155 = vmatprep.subr.mxu0 0.0
    %156 = vmatpush1.msra.mxu0 0.0
    %157 = vmatprep.subr.mxu0 0.0
    %158 = vmatpush1.msra.mxu0 0.0
    %159 = vmatprep.subr.mxu0 0.0
    %160 = vmatpush1.msra.mxu0 %v151
    %161 = vmatprep.subr.mxu0 0.0
    %162 = vmatpush1.msra.mxu0 %v136
    %163 = vmatprep.subr.mxu0 0.0
    %164 = vmatpush1.msra.mxu0 %v135
    %165 = vmatprep.subr.mxu0 0.0
    %166 = vmatpush1.msra.mxu0 %v134
    %167 = vmatprep.subr.mxu0 0.0
    %168 = vmatpush1.msra.mxu0 %v133
    %169 = vmatprep.subr.mxu0 0.0
    %170 = vmatpush1.msra.mxu0 %v132
    %171 = vmatprep.subr.mxu0 0.0
    %172 = vmatpush1.msra.mxu0 %v131
    %173 = vmatprep.subr.mxu0 0.0
    %174 = vmatpush1.msra.mxu0 %v130
    %175 = vmatprep.subr.mxu0 0.0
    %176 = vmatpush1.msra.mxu0 %v129
    %177 = vmatprep.subr.mxu0 0.0
    %178 = vmatpush1.msra.mxu0 %v128
    %179 = vmatprep.subr.mxu0 0.0
    %180 = vmatpush1.msra.mxu0 %v127
    %181 = vmatprep.subr.mxu0 0.0
    %182 = vmatpush1.msra.mxu0 %v126
    %183 = vmatprep.subr.mxu0 0.0
    %184 = vmatpush1.msra.mxu0 %v125
    %185 = vmatprep.subr.mxu0 0.0
    %186 = vmatpush2.msra.mxu0 0.0
    %187 = vmatprep.subr.mxu0 0.0
    %188 = vmatpush2.msra.mxu0 0.0
    %189 = vmatprep.subr.mxu0 0.0
    %190 = vmatpush2.msra.mxu0 0.0
    %191 = vmatprep.subr.mxu0 0.0
    %192 = vmatpush2.msra.mxu0 0.0
    %193 = vmatprep.subr.mxu0 0.0
    %194 = vmatpush2.msra.mxu0 0.0
    %195 = vmatprep.subr.mxu0 0.0
    %196 = vmatpush2.msra.mxu0 0.0
    %197 = vmatprep.subr.mxu0 0.0
    %198 = vmatpush2.msra.mxu0 0.0
    %199 = vmatprep.subr.mxu0 0.0
    %200 = vmatpush2.msra.mxu0 0.0
    %201 = vmatprep.subr.mxu0 0.0
    %202 = vmatpush2.msra.mxu0 0.0
    %203 = vmatprep.subr.mxu0 0.0
    %204 = vmatpush2.msra.mxu0 0.0
    %205 = vmatprep.subr.mxu0 0.0
    %206 = vmatpush2.msra.mxu0 0.0
    %207 = vmatprep.subr.mxu0 0.0
    %208 = vmatpush2.msra.mxu0 0.0
    %209 = vmatprep.subr.mxu0 0.0
    %210 = vmatpush2.msra.mxu0 0.0
    %211 = vmatprep.subr.mxu0 0.0
    %212 = vmatpush2.msra.mxu0 0.0
    %213 = vmatprep.subr.mxu0 0.0
    %214 = vmatpush2.msra.mxu0 0.0
    %215 = vmatprep.subr.mxu0 0.0
    %216 = vmatpush2.msra.mxu0 0.0
    %217 = vmatprep.mubr.f32.mxu0 0.0
    %218 = vmatmul.mubr.f32.gmra.mxu0 %v147
    %v219 = vpop.f32.mrf.mxu0
    %v220 = vadd.f32 %v143, %v219
    %v221 = vpop.f32.mrf.mxu0
    %222 = vdwg.mxu0
    %v223 = vmax.f32 %v220, 0.0
    %v224 = vld [vmem:[#allocation5] sm:$0xff]
    %v225 = vld [vmem:[#allocation5 + $0x8] sm:$0xff]
    %v226 = vld [vmem:[#allocation5 + $0x10] sm:$0xff]
    %v227 = vld [vmem:[#allocation5 + $0x18] sm:$0xff]
    %v228 = vld [vmem:[#allocation5 + $0x20] sm:$0xff]
    %v229 = vld [vmem:[#allocation5 + $0x28] sm:$0xff]
    %v230 = vld [vmem:[#allocation5 + $0x30] sm:$0xff]
    %v231 = vld [vmem:[#allocation5 + $0x38] sm:$0xff]
    %v232 = vld [vmem:[#allocation5 + $0x40] sm:$0xff]
    %v233 = vld [vmem:[#allocation5 + $0x48] sm:$0xff]
    %v234 = vld [vmem:[#allocation5 + $0x50] sm:$0xff]
    %v235 = vld [vmem:[#allocation5 + $0x58] sm:$0xff]
    %v236 = vld [vmem:[#allocation5 + $0x60] sm:$0xf]
    %v237 = vld [vmem:[%s6] sm:$0x1]
    %v239 = vlaneseq
    %v240 = vshrl.u32 %v239, 7
    %v241 = vsub.s32 0, %v240
    %v242 = vrot.slane %v237, %v241
    %v245 = vsel %vm145, %v223, 0
    %v248 = vsel %vm149, %v236, 0
    %250 = vmatprep.subr.mxu0 0.0
    %251 = vmatpush1.msra.mxu0 0.0
    %252 = vmatprep.subr.mxu0 0.0
    %253 = vmatpush1.msra.mxu0 0.0
    %254 = vmatprep.subr.mxu0 0.0
    %255 = vmatpush1.msra.mxu0 0.0
    %256 = vmatprep.subr.mxu0 0.0
    %257 = vmatpush1.msra.mxu0 %v248
    %258 = vmatprep.subr.mxu0 0.0
    %259 = vmatpush1.msra.mxu0 %v235
    %260 = vmatprep.subr.mxu0 0.0
    %261 = vmatpush1.msra.mxu0 %v234
    %262 = vmatprep.subr.mxu0 0.0
    %263 = vmatpush1.msra.mxu0 %v233
    %264 = vmatprep.subr.mxu0 0.0
    %265 = vmatpush1.msra.mxu0 %v232
    %266 = vmatprep.subr.mxu0 0.0
    %267 = vmatpush1.msra.mxu0 %v231
    %268 = vmatprep.subr.mxu0 0.0
    %269 = vmatpush1.msra.mxu0 %v230
    %270 = vmatprep.subr.mxu0 0.0
    %271 = vmatpush1.msra.mxu0 %v229
    %272 = vmatprep.subr.mxu0 0.0
    %273 = vmatpush1.msra.mxu0 %v228
    %274 = vmatprep.subr.mxu0 0.0
    %275 = vmatpush1.msra.mxu0 %v227
    %276 = vmatprep.subr.mxu0 0.0
    %277 = vmatpush1.msra.mxu0 %v226
    %278 = vmatprep.subr.mxu0 0.0
    %279 = vmatpush1.msra.mxu0 %v225
    %280 = vmatprep.subr.mxu0 0.0
    %281 = vmatpush1.msra.mxu0 %v224
    %282 = vmatprep.subr.mxu0 0.0
    %283 = vmatpush2.msra.mxu0 0.0
    %284 = vmatprep.subr.mxu0 0.0
    %285 = vmatpush2.msra.mxu0 0.0
    %286 = vmatprep.subr.mxu0 0.0
    %287 = vmatpush2.msra.mxu0 0.0
    %288 = vmatprep.subr.mxu0 0.0
    %289 = vmatpush2.msra.mxu0 0.0
    %290 = vmatprep.subr.mxu0 0.0
    %291 = vmatpush2.msra.mxu0 0.0
    %292 = vmatprep.subr.mxu0 0.0
    %293 = vmatpush2.msra.mxu0 0.0
    %294 = vmatprep.subr.mxu0 0.0
    %295 = vmatpush2.msra.mxu0 0.0
    %296 = vmatprep.subr.mxu0 0.0
    %297 = vmatpush2.msra.mxu0 0.0
    %298 = vmatprep.subr.mxu0 0.0
    %299 = vmatpush2.msra.mxu0 0.0
    %300 = vmatprep.subr.mxu0 0.0
    %301 = vmatpush2.msra.mxu0 0.0
    %302 = vmatprep.subr.mxu0 0.0
    %303 = vmatpush2.msra.mxu0 0.0
    %304 = vmatprep.subr.mxu0 0.0
    %305 = vmatpush2.msra.mxu0 0.0
    %306 = vmatprep.subr.mxu0 0.0
    %307 = vmatpush2.msra.mxu0 0.0
    %308 = vmatprep.subr.mxu0 0.0
    %309 = vmatpush2.msra.mxu0 0.0
    %310 = vmatprep.subr.mxu0 0.0
    %311 = vmatpush2.msra.mxu0 0.0
    %312 = vmatprep.subr.mxu0 0.0
    %313 = vmatpush2.msra.mxu0 0.0
    %314 = vmatprep.mubr.f32.mxu0 0.0
    %315 = vmatmul.mubr.f32.gmra.mxu0 %v245
    %v316 = vpop.f32.mrf.mxu0
    %v317 = vadd.f32 %v242, %v316
    %v318 = vpop.f32.mrf.mxu0
    %319 = vdwg.mxu0
    %v320 = vmax.f32 %v317, 0.0
    %v321 = vld [vmem:[%s7] sm:$0xff]
    %v322 = vld [vmem:[%s7 + $0x8] sm:$0xff]
    %v323 = vld [vmem:[%s7 + $0x10] sm:$0xff]
    %v324 = vld [vmem:[%s7 + $0x18] sm:$0xff]
    %v325 = vld [vmem:[%s7 + $0x20] sm:$0xff]
    %v326 = vld [vmem:[%s7 + $0x28] sm:$0xff]
    %v327 = vld [vmem:[%s7 + $0x30] sm:$0xff]
    %v328 = vld [vmem:[%s7 + $0x38] sm:$0xff]
    %v329 = vld [vmem:[%s7 + $0x40] sm:$0xff]
    %v330 = vld [vmem:[%s7 + $0x48] sm:$0xff]
    %v331 = vld [vmem:[%s7 + $0x50] sm:$0xff]
    %v332 = vld [vmem:[%s7 + $0x58] sm:$0xff]
    %v333 = vld [vmem:[%s7 + $0x60] sm:$0xf]
    %v334 = vld [vmem:[%s8] sm:$0x1]
    %v336 = vlaneseq
    %v337 = vshrl.u32 %v336, 7
    %v338 = vsub.s32 0, %v337
    %v339 = vrot.slane %v334, %v338
    %v342 = vsel %vm145, %v320, 0
    %v345 = vsel %vm149, %v333, 0
    %347 = vmatprep.subr.mxu0 0.0
    %348 = vmatpush1.msra.mxu0 0.0
    %349 = vmatprep.subr.mxu0 0.0
    %350 = vmatpush1.msra.mxu0 0.0
    %351 = vmatprep.subr.mxu0 0.0
    %352 = vmatpush1.msra.mxu0 0.0
    %353 = vmatprep.subr.mxu0 0.0
    %354 = vmatpush1.msra.mxu0 %v345
    %355 = vmatprep.subr.mxu0 0.0
    %356 = vmatpush1.msra.mxu0 %v332
    %357 = vmatprep.subr.mxu0 0.0
    %358 = vmatpush1.msra.mxu0 %v331
    %359 = vmatprep.subr.mxu0 0.0
    %360 = vmatpush1.msra.mxu0 %v330
    %361 = vmatprep.subr.mxu0 0.0
    %362 = vmatpush1.msra.mxu0 %v329
    %363 = vmatprep.subr.mxu0 0.0
    %364 = vmatpush1.msra.mxu0 %v328
    %365 = vmatprep.subr.mxu0 0.0
    %366 = vmatpush1.msra.mxu0 %v327
    %367 = vmatprep.subr.mxu0 0.0
    %368 = vmatpush1.msra.mxu0 %v326
    %369 = vmatprep.subr.mxu0 0.0
    %370 = vmatpush1.msra.mxu0 %v325
    %371 = vmatprep.subr.mxu0 0.0
    %372 = vmatpush1.msra.mxu0 %v324
    %373 = vmatprep.subr.mxu0 0.0
    %374 = vmatpush1.msra.mxu0 %v323
    %375 = vmatprep.subr.mxu0 0.0
    %376 = vmatpush1.msra.mxu0 %v322
    %377 = vmatprep.subr.mxu0 0.0
    %378 = vmatpush1.msra.mxu0 %v321
    %379 = vmatprep.subr.mxu0 0.0
    %380 = vmatpush2.msra.mxu0 0.0
    %381 = vmatprep.subr.mxu0 0.0
    %382 = vmatpush2.msra.mxu0 0.0
    %383 = vmatprep.subr.mxu0 0.0
    %384 = vmatpush2.msra.mxu0 0.0
    %385 = vmatprep.subr.mxu0 0.0
    %386 = vmatpush2.msra.mxu0 0.0
    %387 = vmatprep.subr.mxu0 0.0
    %388 = vmatpush2.msra.mxu0 0.0
    %389 = vmatprep.subr.mxu0 0.0
    %390 = vmatpush2.msra.mxu0 0.0
    %391 = vmatprep.subr.mxu0 0.0
    %392 = vmatpush2.msra.mxu0 0.0
    %393 = vmatprep.subr.mxu0 0.0
    %394 = vmatpush2.msra.mxu0 0.0
    %395 = vmatprep.subr.mxu0 0.0
    %396 = vmatpush2.msra.mxu0 0.0
    %397 = vmatprep.subr.mxu0 0.0
    %398 = vmatpush2.msra.mxu0 0.0
    %399 = vmatprep.subr.mxu0 0.0
    %400 = vmatpush2.msra.mxu0 0.0
    %401 = vmatprep.subr.mxu0 0.0
    %402 = vmatpush2.msra.mxu0 0.0
    %403 = vmatprep.subr.mxu0 0.0
    %404 = vmatpush2.msra.mxu0 0.0
    %405 = vmatprep.subr.mxu0 0.0
    %406 = vmatpush2.msra.mxu0 0.0
    %407 = vmatprep.subr.mxu0 0.0
    %408 = vmatpush2.msra.mxu0 0.0
    %409 = vmatprep.subr.mxu0 0.0
    %410 = vmatpush2.msra.mxu0 0.0
    %411 = vmatprep.mubr.f32.mxu0 0.0
    %412 = vmatmul.mubr.f32.gmra.mxu0 %v342
    %v413 = vpop.f32.mrf.mxu0
    %v414 = vadd.f32 %v339, %v413
    %v415 = vpop.f32.mrf.mxu0
    %416 = vdwg.mxu0
    %v417 = vmax.f32 %v414, 0.0
    %v418 = vld [vmem:[%s9] sm:$0xff]
    %v419 = vld [vmem:[%s9 + $0x8] sm:$0x3]
    %v420 = vld [vmem:[%s10] sm:$0x1]
    %v422 = vlaneseq
    %v423 = vshrl.u32 %v422, 7
    %v424 = vsub.s32 0, %v423
    %v425 = vrot.slane %v420, %v424
    %vm427 = vcmask 80896
    %v429 = vsel %vm427, %v417, 0
    %vm431 = vcmask 1041408
    %v433 = vsel %vm431, %v419, 0
    %435 = vmatprep.subr.mxu0 0.0
    %436 = vmatpush1.msra.mxu0 0.0
    %437 = vmatprep.subr.mxu0 0.0
    %438 = vmatpush1.msra.mxu0 0.0
    %439 = vmatprep.subr.mxu0 0.0
    %440 = vmatpush1.msra.mxu0 0.0
    %441 = vmatprep.subr.mxu0 0.0
    %442 = vmatpush1.msra.mxu0 0.0
    %443 = vmatprep.subr.mxu0 0.0
    %444 = vmatpush1.msra.mxu0 0.0
    %445 = vmatprep.subr.mxu0 0.0
    %446 = vmatpush1.msra.mxu0 0.0
    %447 = vmatprep.subr.mxu0 0.0
    %448 = vmatpush1.msra.mxu0 0.0
    %449 = vmatprep.subr.mxu0 0.0
    %450 = vmatpush1.msra.mxu0 0.0
    %451 = vmatprep.subr.mxu0 0.0
    %452 = vmatpush1.msra.mxu0 0.0
    %453 = vmatprep.subr.mxu0 0.0
    %454 = vmatpush1.msra.mxu0 0.0
    %455 = vmatprep.subr.mxu0 0.0
    %456 = vmatpush1.msra.mxu0 0.0
    %457 = vmatprep.subr.mxu0 0.0
    %458 = vmatpush1.msra.mxu0 0.0
    %459 = vmatprep.subr.mxu0 0.0
    %460 = vmatpush1.msra.mxu0 0.0
    %461 = vmatprep.subr.mxu0 0.0
    %462 = vmatpush1.msra.mxu0 0.0
    %463 = vmatprep.subr.mxu0 0.0
    %464 = vmatpush1.msra.mxu0 %v433
    %465 = vmatprep.subr.mxu0 0.0
    %466 = vmatpush1.msra.mxu0 %v418
    %467 = vmatprep.subr.mxu0 0.0
    %468 = vmatpush2.msra.mxu0 0.0
    %469 = vmatprep.subr.mxu0 0.0
    %470 = vmatpush2.msra.mxu0 0.0
    %471 = vmatprep.subr.mxu0 0.0
    %472 = vmatpush2.msra.mxu0 0.0
    %473 = vmatprep.subr.mxu0 0.0
    %474 = vmatpush2.msra.mxu0 0.0
    %475 = vmatprep.subr.mxu0 0.0
    %476 = vmatpush2.msra.mxu0 0.0
    %477 = vmatprep.subr.mxu0 0.0
    %478 = vmatpush2.msra.mxu0 0.0
    %479 = vmatprep.subr.mxu0 0.0
    %480 = vmatpush2.msra.mxu0 0.0
    %481 = vmatprep.subr.mxu0 0.0
    %482 = vmatpush2.msra.mxu0 0.0
    %483 = vmatprep.subr.mxu0 0.0
    %484 = vmatpush2.msra.mxu0 0.0
    %485 = vmatprep.subr.mxu0 0.0
    %486 = vmatpush2.msra.mxu0 0.0
    %487 = vmatprep.subr.mxu0 0.0
    %488 = vmatpush2.msra.mxu0 0.0
    %489 = vmatprep.subr.mxu0 0.0
    %490 = vmatpush2.msra.mxu0 0.0
    %491 = vmatprep.subr.mxu0 0.0
    %492 = vmatpush2.msra.mxu0 0.0
    %493 = vmatprep.subr.mxu0 0.0
    %494 = vmatpush2.msra.mxu0 0.0
    %495 = vmatprep.subr.mxu0 0.0
    %496 = vmatpush2.msra.mxu0 0.0
    %497 = vmatprep.subr.mxu0 0.0
    %498 = vmatpush2.msra.mxu0 0.0
    %499 = vmatprep.mubr.f32.mxu0 0.0
    %500 = vmatmul.mubr.f32.gmra.mxu0 %v429
    %v501 = vpop.f32.mrf.mxu0
    %v502 = vadd.f32 %v425, %v501
    %v503 = vpop.f32.mrf.mxu0
    %504 = vdwg.mxu0
    %v505 = vmax.f32 %v502, 0.0
    %v506 = vld [vmem:[%s11] sm:$0xff]
    %v507 = vld [vmem:[%s11 + $0x8] sm:$0x3]
    %v508 = vld [vmem:[#allocation2] sm:$0x1]
    %v510 = vlaneseq
    %v511 = vshrl.u32 %v510, 7
    %v512 = vsub.s32 0, %v511
    %v513 = vrot.slane %v508, %v512
    %v516 = vsel %vm427, %v505, 0
    %v519 = vsel %vm431, %v507, 0
    %521 = vmatprep.subr.mxu0 0.0
    %522 = vmatpush1.msra.mxu0 0.0
    %523 = vmatprep.subr.mxu0 0.0
    %524 = vmatpush1.msra.mxu0 0.0
    %525 = vmatprep.subr.mxu0 0.0
    %526 = vmatpush1.msra.mxu0 0.0
    %527 = vmatprep.subr.mxu0 0.0
    %528 = vmatpush1.msra.mxu0 0.0
    %529 = vmatprep.subr.mxu0 0.0
    %530 = vmatpush1.msra.mxu0 0.0
    %531 = vmatprep.subr.mxu0 0.0
    %532 = vmatpush1.msra.mxu0 0.0
    %533 = vmatprep.subr.mxu0 0.0
    %534 = vmatpush1.msra.mxu0 0.0
    %535 = vmatprep.subr.mxu0 0.0
    %536 = vmatpush1.msra.mxu0 0.0
    %537 = vmatprep.subr.mxu0 0.0
    %538 = vmatpush1.msra.mxu0 0.0
    %539 = vmatprep.subr.mxu0 0.0
    %540 = vmatpush1.msra.mxu0 0.0
    %541 = vmatprep.subr.mxu0 0.0
    %542 = vmatpush1.msra.mxu0 0.0
    %543 = vmatprep.subr.mxu0 0.0
    %544 = vmatpush1.msra.mxu0 0.0
    %545 = vmatprep.subr.mxu0 0.0
    %546 = vmatpush1.msra.mxu0 0.0
    %547 = vmatprep.subr.mxu0 0.0
    %548 = vmatpush1.msra.mxu0 0.0
    %549 = vmatprep.subr.mxu0 0.0
    %550 = vmatpush1.msra.mxu0 %v519
    %551 = vmatprep.subr.mxu0 0.0
    %552 = vmatpush1.msra.mxu0 %v506
    %553 = vmatprep.subr.mxu0 0.0
    %554 = vmatpush2.msra.mxu0 0.0
    %555 = vmatprep.subr.mxu0 0.0
    %556 = vmatpush2.msra.mxu0 0.0
    %557 = vmatprep.subr.mxu0 0.0
    %558 = vmatpush2.msra.mxu0 0.0
    %559 = vmatprep.subr.mxu0 0.0
    %560 = vmatpush2.msra.mxu0 0.0
    %561 = vmatprep.subr.mxu0 0.0
    %562 = vmatpush2.msra.mxu0 0.0
    %563 = vmatprep.subr.mxu0 0.0
    %564 = vmatpush2.msra.mxu0 0.0
    %565 = vmatprep.subr.mxu0 0.0
    %566 = vmatpush2.msra.mxu0 0.0
    %567 = vmatprep.subr.mxu0 0.0
    %568 = vmatpush2.msra.mxu0 0.0
    %569 = vmatprep.subr.mxu0 0.0
    %570 = vmatpush2.msra.mxu0 0.0
    %571 = vmatprep.subr.mxu0 0.0
    %572 = vmatpush2.msra.mxu0 0.0
    %573 = vmatprep.subr.mxu0 0.0
    %574 = vmatpush2.msra.mxu0 0.0
    %575 = vmatprep.subr.mxu0 0.0
    %576 = vmatpush2.msra.mxu0 0.0
    %577 = vmatprep.subr.mxu0 0.0
    %578 = vmatpush2.msra.mxu0 0.0
    %579 = vmatprep.subr.mxu0 0.0
    %580 = vmatpush2.msra.mxu0 0.0
    %581 = vmatprep.subr.mxu0 0.0
    %582 = vmatpush2.msra.mxu0 0.0
    %583 = vmatprep.subr.mxu0 0.0
    %584 = vmatpush2.msra.mxu0 0.0
    %585 = vmatprep.mubr.f32.mxu0 0.0
    %586 = vmatmul.mubr.f32.gmra.mxu0 %v516
    %v587 = vpop.f32.mrf.mxu0
    %v588 = vadd.f32 %v513, %v587
    %v589 = vpop.f32.mrf.mxu0
    %590 = vdwg.mxu0
    %v591 = vxor.u32 %v588, 2147483648
    %v592 = vmul.f32 %v591, 1.442695
    %v593 = vpow.pop %v592
    %v594 = vadd.f32 %v593, 1.0
    %v595 = vrcp.pop %v594
    %v596 = vmul.f32 1.0, %v595
    %v597 = vlaneseq
    %v598 = vand.u32 %v597, 127
    %vm599 = vcmp.eq.s32.totalorder %v598, 0
    %v600 = vsub.f32 1.0, %v596
    %602 = vset.pattern.permute.xlu0 0
    %603 = vperm.xlu0 %602, %v596
    %v604 = vpop.permute.xlu0 %603
    %607 = vset.pattern.permute.xlu0 0
    %608 = vperm.xlu0 %607, %v600
    %v609 = vpop.permute.xlu0 %608
    %v611 = vsel %vm599, %v604, %v609
    %vm612 = vcmask 15360
    %613 = vst.msk [vmem:[%s13] sm:$0xff] %vm612, %v611
    // Predicated region
    $region62: #{tpu_custom_call.1} parent=1 // pred_check
      _
    $region63: #{tpu_custom_call.1} parent=1 // pred_check_branch
      %615 = sbr.rel (0) target = $region65
    $region64: #{tpu_custom_call.1} parent=1 // pred_region
      _
    $region65: #{tpu_custom_call.1} parent=1 // pred_fallthru
      _
    // Predicated region
    $region66: #{tpu_custom_call.1} parent=1 // pred_check
      _
    $region67: #{tpu_custom_call.1} parent=1 // pred_check_branch
      %617 = sbr.rel (0) target = $region69
    $region68: #{tpu_custom_call.1} parent=1 // pred_region
      _
    $region69: #{tpu_custom_call.1} parent=1 // pred_fallthru
      _
    %618 = vsyncpa [#allocation4], 1
    %619 = vsyncpa [#allocation6], 1

</llo_original>
